<compile_context>
chip_gen: v5e
topology: v5e:2x2
jax: 0.10.0
libtpu: 0.0.40
codegen_flags: <defaults>
</compile_context>

<pallas_src>
import functools
import math

import jax
import jax.numpy as jnp
from jax.experimental import pallas as pl
from jax.experimental.pallas import tpu as pltpu


def _attention_kernel(x_ref, w_ref, b_ref, o_ref, *, inv_scale):
    bt, s, d = x_ref.shape
    dp3 = w_ref.shape[1]
    dp = dp3 // 3

    # bf16 MXU inputs, f32 accumulation.
    x = x_ref[...].reshape(bt * s, d).astype(jnp.bfloat16)       # (Bt*S, D)
    w = w_ref[...].astype(jnp.bfloat16)                          # (D, 3*Dp) fused, pre-transposed
    b = b_ref[...].astype(jnp.float32)                           # (1, 3*Dp)

    # Single fused QKV projection: one MXU pass with N = 3*Dp.
    qkv = jnp.dot(x, w, preferred_element_type=jnp.float32) + b  # (Bt*S, 3*Dp) f32
    qkv = qkv.reshape(bt, s, dp3)
    q = qkv[:, :, :dp].astype(jnp.bfloat16)                      # (Bt, S, Dp)
    k = qkv[:, :, dp:2 * dp].astype(jnp.bfloat16)
    v = qkv[:, :, 2 * dp:].astype(jnp.bfloat16)

    # scores = q @ k^T / sqrt(D): contraction on the last dim -> no k relayout.
    scores = jnp.einsum("bqd,bkd->bqk", q, k,
                        preferred_element_type=jnp.float32) * inv_scale  # (Bt, S, S)

    # softmax over the key axis (dim=2 in the PyTorch code), in f32.
    m = jnp.max(scores, axis=-1, keepdims=True)
    e = jnp.exp(scores - m)
    denom = jnp.sum(e, axis=-1, keepdims=True)
    attn = e / denom           # exact divide: one value per query row, essentially free

    # context = attn @ v   (padded v columns are exactly zero -> padded ctx cols are zero)
    ctx = jnp.einsum("bqk,bkd->bqd", attn.astype(jnp.bfloat16), v,
                     preferred_element_type=jnp.float32)                 # (Bt, S, Dp)
    o_ref[...] = ctx.astype(o_ref.dtype)


def _round_up(n, m):
    return ((n + m - 1) // m) * m


def _pad_cols(a2d, cols):
    pad = cols - a2d.shape[1]
    if pad == 0:
        return a2d
    return jnp.pad(a2d, ((0, 0), (0, pad)))


def _pad_last(a, n):
    pad = n - a.shape[-1]
    if pad == 0:
        return a
    return jnp.pad(a, [(0, 0)] * (a.ndim - 1) + [(0, pad)])


def fuse_qkv_params(wq, bq, wk, bk, wv, bv):
    """One-time parameter prep (hoisted out of the per-call path).

    PyTorch Linear weights are (out, in); transpose to (in, out), zero-pad the
    OUT dim of each to Dp = round_up(D, 128), and fuse into a single
    (D, 3*Dp) weight + (1, 3*Dp) bias.  Zero-padded columns keep the padded
    q/k/v columns exactly zero, so scores/context are unchanged.
    """
    D = wq.shape[0]
    Dp = _round_up(D, 128)
    w_qkv = jnp.concatenate(
        [_pad_cols(wq.T, Dp), _pad_cols(wk.T, Dp), _pad_cols(wv.T, Dp)], axis=1)  # (D, 3*Dp)
    b_qkv = jnp.concatenate(
        [_pad_last(bq, Dp), _pad_last(bk, Dp), _pad_last(bv, Dp)]).reshape(1, 3 * Dp)
    return w_qkv, b_qkv


def _vmem_limit_bytes():
    """~75% of per-core VMEM capacity; falls back to 48 MiB (safe on v5e/v6e/v7x)."""
    try:
        info_fn = getattr(pltpu, "get_tpu_info", None)
        if info_fn is not None:
            cap = getattr(info_fn(), "vmem_capacity_bytes", None)
            if cap:
                return int(cap * 3 // 4)
    except Exception:
        pass
    return 48 << 20


def _pick_batch_tile(B, S, D, Dp, vmem_limit):
    """Largest divisor of B that (a) keeps the per-step working set within ~half
    the VMEM limit and (b) leaves the grid with >= 2 steps so both v7x
    TensorCores get work under dimension_semantics=("parallel",)."""
    per_b = (
        2 * S * D * 4            # x block, double-buffered (f32)
        + 2 * S * Dp * 4         # out block, double-buffered (f32)
        + S * 3 * Dp * (4 + 2)   # qkv f32 + bf16 q/k/v copies
        + 3 * S * S * 4          # scores / e / attn (f32)
        + S * S * 2              # attn bf16 copy
        + S * Dp * 4             # ctx f32
    )
    fixed = 2 * D * 3 * Dp * (4 + 2) + 2 * 3 * Dp * 4   # fused weight (+bf16 copy) + bias
    budget = max(per_b, vmem_limit // 2 - fixed)
    cap_vmem = max(1, budget // per_b)
    cap_cores = max(1, -(-B // 2))                       # ceil(B/2): keep >= 2 grid steps
    cap = max(1, min(B, cap_vmem, cap_cores))
    best = 1
    for c in range(1, cap + 1):
        if B % c == 0:
            best = c
    return best


def attention_layer(x, w_qkv, b_qkv):
    """x: (B, S, D); (w_qkv, b_qkv) from fuse_qkv_params.  Returns (B, S, D)."""
    B, S, D = x.shape
    Dp = w_qkv.shape[1] // 3
    assert w_qkv.shape[0] == D
    inv_scale = 1.0 / math.sqrt(D)           # scale uses the ORIGINAL D

    vmem_limit = _vmem_limit_bytes()
    Bt = _pick_batch_tile(B, S, D, Dp, vmem_limit)
    grid = (B // Bt,)

    kernel = functools.partial(_attention_kernel, inv_scale=inv_scale)

    # x streamed UNPADDED (last dim = full array dim D): no padded HBM copy of the input.
    x_spec = pl.BlockSpec((Bt, S, D), lambda i: (i, 0, 0))
    w_spec = pl.BlockSpec((D, 3 * Dp), lambda i: (0, 0))
    b_spec = pl.BlockSpec((1, 3 * Dp), lambda i: (0, 0))
    o_spec = pl.BlockSpec((Bt, S, Dp), lambda i: (i, 0, 0))   # lane-dense output stores

    out_p = pl.pallas_call(
        kernel,
        out_shape=jax.ShapeDtypeStruct((B, S, Dp), x.dtype),
        grid_spec=pltpu.PrefetchScalarGridSpec(
            num_scalar_prefetch=0,
            grid=grid,
            in_specs=[x_spec, w_spec, b_spec],
            out_specs=o_spec,
        ),
        compiler_params=pltpu.CompilerParams(
            dimension_semantics=("parallel",),
            vmem_limit_bytes=vmem_limit,
        ),
    )(x, w_qkv, b_qkv)

    return out_p[..., :D]


def attention_layer_ref(x, wq, bq, wk, bk, wv, bv):
    """Plain-JAX f32 reference mirroring the PyTorch forward."""
    D = x.shape[-1]
    q = jnp.einsum("bsd,ed->bse", x, wq) + bq
    k = jnp.einsum("bsd,ed->bse", x, wk) + bk
    v = jnp.einsum("bsd,ed->bse", x, wv) + bv
    scores = jnp.einsum("bse,bte->bst", q, k) / jnp.sqrt(jnp.float32(D))
    attn = jax.nn.softmax(scores, axis=2)
    return jnp.einsum("bst,btd->bsd", attn, v)


if __name__ == "__main__":
    # Small shapes consistent with the module: batch=2, seq=8, input_dim=32.
    B, S, D = 2, 8, 32
    key = jax.random.PRNGKey(0)
    kx, kwq, kbq, kwk, kbk, kwv, kbv = jax.random.split(key, 7)

    x = jax.random.normal(kx, (B, S, D), dtype=jnp.float32)
    # Deterministic init for Linear params (PyTorch shapes: W (D, D) [out,in], b (D,)).
    bound = 1.0 / math.sqrt(D)
    wq = jax.random.uniform(kwq, (D, D), jnp.float32, -bound, bound)
    bq = jax.random.uniform(kbq, (D,), jnp.float32, -bound, bound)
    wk = jax.random.uniform(kwk, (D, D), jnp.float32, -bound, bound)
    bk = jax.random.uniform(kbk, (D,), jnp.float32, -bound, bound)
    wv = jax.random.uniform(kwv, (D, D), jnp.float32, -bound, bound)
    bv = jax.random.uniform(kbv, (D,), jnp.float32, -bound, bound)

    # One-time parameter prep (hoisted out of the per-call path).
    w_qkv, b_qkv = fuse_qkv_params(wq, bq, wk, bk, wv, bv)

    out = attention_layer(x, w_qkv, b_qkv)
    out = jax.block_until_ready(out)

    ref = attention_layer_ref(x, wq, bq, wk, bk, wv, bv)
    assert out.shape == (B, S, D)
    # Tolerance reflects bf16 MXU inputs (f32 accumulation, exact f32 softmax).
    err = float(jnp.max(jnp.abs(out - ref)))
    assert jnp.allclose(out, ref, atol=2e-2, rtol=2e-2), err

    print("KERNEL_OK")
</pallas_src>

<mosaic_0001>
module attributes {stable_mosaic.version = 11 : i64} {
  func.func @_attention_kernel(%arg0: i32, %arg1: memref<1x8x32xf32, #tpu.memory_space<vmem>>, %arg2: memref<32x384xf32, #tpu.memory_space<vmem>>, %arg3: memref<1x384xf32, #tpu.memory_space<vmem>>, %arg4: memref<1x8x128xf32, #tpu.memory_space<vmem>>) attributes {dimension_semantics = [#tpu.dimension_semantics<parallel>], iteration_bounds = array<i64: 2>, scalar_prefetch = 0 : i64, scratch_operands = 0 : i64, tpu.core_type = #tpu.core_type<tc>, window_params = [{transform_indices = @transform_0, window_bounds = array<i64: 1, 8, 32>}, {pipeline_mode = #tpu.pipeline_mode<synchronous>, transform_indices = @transform_1, window_bounds = array<i64: 32, 384>}, {pipeline_mode = #tpu.pipeline_mode<synchronous>, transform_indices = @transform_2, window_bounds = array<i64: 1, 384>}, {transform_indices = @transform_3, window_bounds = array<i64: 1, 8, 128>}]} {
    %c0 = arith.constant 0 : index
    %c0_0 = arith.constant 0 : index
    %c0_1 = arith.constant 0 : index
    %0 = vector.load %arg1[%c0, %c0_0, %c0_1] : memref<1x8x32xf32, #tpu.memory_space<vmem>>, vector<1x8x32xf32>
    %1 = vector.shape_cast %0 : vector<1x8x32xf32> to vector<8x32xf32>
    %2 = arith.truncf %1 : vector<8x32xf32> to vector<8x32xbf16>
    %c0_2 = arith.constant 0 : index
    %c0_3 = arith.constant 0 : index
    %3 = vector.load %arg2[%c0_2, %c0_3] : memref<32x384xf32, #tpu.memory_space<vmem>>, vector<32x384xf32>
    %4 = arith.truncf %3 : vector<32x384xf32> to vector<32x384xbf16>
    %c0_4 = arith.constant 0 : index
    %c0_5 = arith.constant 0 : index
    %5 = vector.load %arg3[%c0_4, %c0_5] : memref<1x384xf32, #tpu.memory_space<vmem>>, vector<1x384xf32>
    %cst = arith.constant dense<0.000000e+00> : vector<8x384xf32>
    %6 = tpu.matmul %2, %4, %cst {dimension_numbers = #tpu.dot_dimension_numbers<[1], [0], [0], [1], [0, 0, 1, 1], [], []>} : vector<8x32xbf16>, vector<32x384xbf16>, vector<8x384xf32> -> vector<8x384xf32>
    %7 = vector.broadcast %5 : vector<1x384xf32> to vector<8x384xf32>
    %8 = arith.addf %6, %7 : vector<8x384xf32>
    %9 = vector.shape_cast %8 : vector<8x384xf32> to vector<1x8x384xf32>
    %10 = vector.extract_strided_slice %9 {offsets = [0, 0, 0], sizes = [1, 8, 128], strides = [1, 1, 1]} : vector<1x8x384xf32> to vector<1x8x128xf32>
    %11 = arith.truncf %10 : vector<1x8x128xf32> to vector<1x8x128xbf16>
    %12 = vector.extract_strided_slice %9 {offsets = [0, 0, 128], sizes = [1, 8, 128], strides = [1, 1, 1]} : vector<1x8x384xf32> to vector<1x8x128xf32>
    %13 = arith.truncf %12 : vector<1x8x128xf32> to vector<1x8x128xbf16>
    %14 = vector.extract_strided_slice %9 {offsets = [0, 0, 256], sizes = [1, 8, 128], strides = [1, 1, 1]} : vector<1x8x384xf32> to vector<1x8x128xf32>
    %15 = arith.truncf %14 : vector<1x8x128xf32> to vector<1x8x128xbf16>
    "tpu.trace_start"() <{level = 10 : i32, message = "bqd,bkd->bqk"}> : () -> ()
    %cst_6 = arith.constant dense<0.000000e+00> : vector<1x8x8xf32>
    %16 = tpu.matmul %11, %13, %cst_6 {dimension_numbers = #tpu.dot_dimension_numbers<[2], [2], [1], [1], [0, 0, 0, 1, 1, 1], [0], [0]>} : vector<1x8x128xbf16>, vector<1x8x128xbf16>, vector<1x8x8xf32> -> vector<1x8x8xf32>
    "tpu.trace_stop"() : () -> ()
    %cst_7 = arith.constant 0.176776692 : f32
    %17 = vector.broadcast %cst_7 : f32 to vector<1x8x8xf32>
    %18 = arith.mulf %16, %17 : vector<1x8x8xf32>
    %cst_8 = arith.constant dense<0xFF800000> : vector<1x8xf32>
    %19 = vector.multi_reduction <maximumf>, %18, %cst_8 [2] : vector<1x8x8xf32> to vector<1x8xf32>
    %20 = vector.shape_cast %19 : vector<1x8xf32> to vector<1x8x1xf32>
    %21 = vector.broadcast %20 : vector<1x8x1xf32> to vector<1x8x8xf32>
    %22 = arith.subf %18, %21 : vector<1x8x8xf32>
    %23 = math.exp %22 : vector<1x8x8xf32>
    %cst_9 = arith.constant dense<0.000000e+00> : vector<1x8xf32>
    %24 = vector.multi_reduction <add>, %23, %cst_9 [2] : vector<1x8x8xf32> to vector<1x8xf32>
    %25 = vector.shape_cast %24 : vector<1x8xf32> to vector<1x8x1xf32>
    %26 = vector.broadcast %25 : vector<1x8x1xf32> to vector<1x8x8xf32>
    %27 = arith.divf %23, %26 : vector<1x8x8xf32>
    %28 = arith.truncf %27 : vector<1x8x8xf32> to vector<1x8x8xbf16>
    "tpu.trace_start"() <{level = 10 : i32, message = "bqk,bkd->bqd"}> : () -> ()
    %cst_10 = arith.constant dense<0.000000e+00> : vector<1x8x128xf32>
    %29 = tpu.matmul %28, %15, %cst_10 {dimension_numbers = #tpu.dot_dimension_numbers<[2], [1], [1], [2], [0, 0, 0, 1, 1, 2], [0], [0]>} : vector<1x8x8xbf16>, vector<1x8x128xbf16>, vector<1x8x128xf32> -> vector<1x8x128xf32>
    "tpu.trace_stop"() : () -> ()
    %c0_11 = arith.constant 0 : index
    %c0_12 = arith.constant 0 : index
    %c0_13 = arith.constant 0 : index
    %30 = vector.load %arg4[%c0_11, %c0_12, %c0_13] : memref<1x8x128xf32, #tpu.memory_space<vmem>>, vector<1x8x128xf32>
    tpu.vector_store %arg4[%c0_11, %c0_12, %c0_13], %29 {strides = array<i32>} : memref<1x8x128xf32, #tpu.memory_space<vmem>>, vector<1x8x128xf32>,
    return
  }
  func.func @transform_0(%arg0: i32) -> (i32, i32, i32) {
    %c0_i32 = arith.constant 0 : i32
    %c0_i32_0 = arith.constant 0 : i32
    %c0_i32_1 = arith.constant 0 : i32
    return %arg0, %c0_i32, %c0_i32_0 : i32, i32, i32
  }
  func.func @transform_1(%arg0: i32) -> (i32, i32) {
    %c0_i32 = arith.constant 0 : i32
    %c0_i32_0 = arith.constant 0 : i32
    %c0_i32_1 = arith.constant 0 : i32
    return %c0_i32, %c0_i32_0 : i32, i32
  }
  func.func @transform_2(%arg0: i32) -> (i32, i32) {
    %c0_i32 = arith.constant 0 : i32
    %c0_i32_0 = arith.constant 0 : i32
    %c0_i32_1 = arith.constant 0 : i32
    return %c0_i32, %c0_i32_0 : i32, i32
  }
  func.func @transform_3(%arg0: i32) -> (i32, i32, i32) {
    %c0_i32 = arith.constant 0 : i32
    %c0_i32_0 = arith.constant 0 : i32
    %c0_i32_1 = arith.constant 0 : i32
    return %arg0, %c0_i32, %c0_i32_0 : i32, i32, i32
  }
}

</mosaic_0001>

<llo_original>
// kernel: tpu_custom_call.1
$region0: #{tpu_custom_call.1}
  #allocation0 [shape = 'u32[]', space=smem, size = 0x4, offset = 0x4, fixed_abs, tag = 'smem constant byte address 0x4 - core index']
  #allocation1 [shape = 'u32[72,128]{1,0:T(1,128)}', space=vmem, size = 0x9000, scoped, tag = 'internal scratch']
  %s0 = inlined_call_operand.hbm [shape: f32[2,8,32], index: 0, kind: input, shape index: {}]
  %s1 = inlined_call_operand.hbm [shape: f32[32,384], index: 1, kind: input, shape index: {}]
  %s2 = inlined_call_operand.hbm [shape: f32[1,384], index: 2, kind: input, shape index: {}]
  %s3 = inlined_call_operand.hbm [shape: f32[2,8,128], index: 3, kind: output, shape index: {}]
  %s4 = sld [smem:[#allocation0]]
  $region57: #{tpu_custom_call.1} parent=0
    _
  %s6 = ssub.s32 1, %s4
  %s7 = scalar_select 0, %s6, %s4
  $region1: #{tpu_custom_call.1} parent=0
    #allocation2 [shape = 'u8[8192]{0}', space=vmem, size = 0x2000, scoped, tag = 'input window, operand 0']
    #allocation3 [shape = 's32[2]{0}', space=sflag, size = 0x8, scoped, tag = 'scoped memory for tpu_custom_call.1']
    #allocation4 [shape = 's32[2]{0}', space=sflag, size = 0x8, scoped, tag = 'scoped memory for tpu_custom_call.1']
    #allocation5 [shape = 'u8[49152]{0}', space=vmem, size = 0xc000, scoped, tag = 'input window, operand 1, single buffered']
    #allocation6 [shape = 's32[1]{0}', space=sflag, size = 0x4, scoped, tag = 'scoped memory for tpu_custom_call.1']
    #allocation7 [shape = 'u8[1536]{0}', space=vmem, size = 0x800, scoped, tag = 'input window, operand 2, single buffered']
    #allocation8 [shape = 'u8[8192]{0}', space=vmem, size = 0x2000, scoped, tag = 'output window, operand 0']
    %8 = vsyncpa [#allocation3], 0
    %s9 = scalar_lea.sflag [#allocation3], 1
    %10 = vsyncpa %s9, 0
    %11 = vsyncpa [#allocation6], 0
    %12 = vsyncpa [#allocation4], 0
    %s13 = scalar_lea.sflag [#allocation4], 1
    %14 = vsyncpa %s13, 0
    loop: start=0, step=1, limit=4
    $region2: #{tpu_custom_call.1} parent=1 // loop_pre_header
      _
    $region3: #{tpu_custom_call.1} parent=1 // loop_header
      %s16 = sphi 0, %s20
      %p17 = scmp.ge.s32.totalorder %s16, 4
      %s26 = sphi 0, %s28
      %s29 = sphi 0, %s26
      %s30 = sphi 0, %s29
      %s46 = sphi 0, %s30
      %s50 = sphi 0, %s50
      %s52 = sphi 0, %s50
      %s53 = sphi 0, %s52
      %s67 = sphi 0, %s53
      %s71 = sphi 0, %s71
      %s73 = sphi 0, %s71
      %s74 = sphi 0, %s73
      %s88 = sphi 0, %s74
      %s94 = sphi 0, %s96
      %s97 = sphi 0, %s94
      %s98 = sphi 0, %s97
      %s114 = sphi 0, %s98
    $region4: #{tpu_custom_call.1} parent=1 // loop_header_branch
      %19 = sbr.rel (%p17) target = $region8
    $region5: #{tpu_custom_call.1} parent=1 // loop_body
      %s21 = ssub.s32 %s16, 1
      %s22 = ssub.s32 %s16, 2
      %s23 = sadd.s32 %s16, 1
      %s24 = ssub.s32 %s16, %s23
      %p25 = scmp.eq.s32.totalorder %s24, 0
      %s27 = sadd.s32 %s26, 1
      %s28 = scalar_select %p25, %s26, %s27
      %p31 = pneg %p25
      %p32 = scmp.eq.s32.totalorder %s16, 1
      %p33 = por %p31, %p32
      %p34 = scmp.ne.s32.totalorder %s26, %s29
      %p35 = scmp.eq.s32.totalorder %s16, 0
      %p36 = por %p34, %p35
      %p37 = scmp.ne.s32.totalorder %s26, %s29
      %p38 = scmp.eq.s32.totalorder %s21, 1
      %p39 = por %p37, %p38
      %p40 = scmp.ne.s32.totalorder %s29, %s30
      %p41 = scmp.eq.s32.totalorder %s21, 0
      %p42 = por %p40, %p41
      %p43 = scmp.ne.s32.totalorder %s29, %s30
      %p44 = scmp.eq.s32.totalorder %s22, 1
      %p45 = por %p43, %p44
      %p47 = scmp.ne.s32.totalorder %s30, %s46
      %p48 = scmp.eq.s32.totalorder %s22, 0
      %p49 = por %p47, %p48
      %s51 = sadd.s32 %s50, 1
      %p54 = scmp.eq.s32.totalorder %s16, 1
      %p55 = scmp.ne.s32.totalorder %s50, %s52
      %p56 = scmp.eq.s32.totalorder %s16, 0
      %p57 = por %p55, %p56
      %p58 = scmp.ne.s32.totalorder %s50, %s52
      %p59 = scmp.eq.s32.totalorder %s21, 1
      %p60 = por %p58, %p59
      %p61 = scmp.ne.s32.totalorder %s52, %s53
      %p62 = scmp.eq.s32.totalorder %s21, 0
      %p63 = por %p61, %p62
      %p64 = scmp.ne.s32.totalorder %s52, %s53
      %p65 = scmp.eq.s32.totalorder %s22, 1
      %p66 = por %p64, %p65
      %p68 = scmp.ne.s32.totalorder %s53, %s67
      %p69 = scmp.eq.s32.totalorder %s22, 0
      %p70 = por %p68, %p69
      %s72 = sadd.s32 %s71, 1
      %p75 = scmp.eq.s32.totalorder %s16, 1
      %p76 = scmp.ne.s32.totalorder %s71, %s73
      %p77 = scmp.eq.s32.totalorder %s16, 0
      %p78 = por %p76, %p77
      %p79 = scmp.ne.s32.totalorder %s71, %s73
      %p80 = scmp.eq.s32.totalorder %s21, 1
      %p81 = por %p79, %p80
      %p82 = scmp.ne.s32.totalorder %s73, %s74
      %p83 = scmp.eq.s32.totalorder %s21, 0
      %p84 = por %p82, %p83
      %p85 = scmp.ne.s32.totalorder %s73, %s74
      %p86 = scmp.eq.s32.totalorder %s22, 1
      %p87 = por %p85, %p86
      %p89 = scmp.ne.s32.totalorder %s74, %s88
      %p90 = scmp.eq.s32.totalorder %s22, 0
      %p91 = por %p89, %p90
      %s92 = ssub.s32 %s16, %s23
      %p93 = scmp.eq.s32.totalorder %s92, 0
      %s95 = sadd.s32 %s94, 1
      %s96 = scalar_select %p93, %s94, %s95
      %p99 = pneg %p93
      %p100 = scmp.eq.s32.totalorder %s16, 1
      %p101 = por %p99, %p100
      %p102 = scmp.ne.s32.totalorder %s94, %s97
      %p103 = scmp.eq.s32.totalorder %s16, 0
      %p104 = por %p102, %p103
      %p105 = scmp.ne.s32.totalorder %s94, %s97
      %p106 = scmp.eq.s32.totalorder %s21, 1
      %p107 = por %p105, %p106
      %p108 = scmp.ne.s32.totalorder %s97, %s98
      %p109 = scmp.eq.s32.totalorder %s21, 0
      %p110 = por %p108, %p109
      %p111 = scmp.ne.s32.totalorder %s97, %s98
      %p112 = scmp.eq.s32.totalorder %s22, 1
      %p113 = por %p111, %p112
      %p115 = scmp.ne.s32.totalorder %s98, %s114
      %p116 = scmp.eq.s32.totalorder %s22, 0
      %p117 = por %p115, %p116
      %p118 = scmp.le.s32.totalorder 1, %s16
      %p119 = scmp.lt.s32.totalorder %s16, 3
      %p120 = pnand %p118, %p119
      %p121 = pneg %p120
      // Predicated region
      $region9: #{tpu_custom_call.1} parent=5 // pred_check
        _
      $region10: #{tpu_custom_call.1} parent=5 // pred_check_branch
        %123 = sbr.rel (%p120) target = $region12
      $region11: #{tpu_custom_call.1} parent=5 // pred_region
        %s124 = ssub.s32 %s16, 1
        // Predicated region
        $region13: #{tpu_custom_call.1} parent=11 // pred_check
          %p125 = pneg %p63
        $region14: #{tpu_custom_call.1} parent=11 // pred_check_branch
          %127 = sbr.rel (%p125) target = $region16
        $region15: #{tpu_custom_call.1} parent=11 // pred_region
          %129 = vsyncadd [#allocation6], 0
          %s130 = sshll.u32 %s1, 4
          %s131 = int_to_ptr.hbm [resolvable:$true] %s130
          %s132 = sshll.u32 [#allocation5], 4
          %s133 = int_to_ptr.vmem [resolvable:$true] %s132
          %138 = dma.hbm_to_vmem [thread:$0]  %s131, 1536, %s133, [#allocation6], 384, 384, 24
        $region16: #{tpu_custom_call.1} parent=11 // pred_fallthru
          _
        // Predicated region
        $region17: #{tpu_custom_call.1} parent=11 // pred_check
          %p139 = pneg %p84
        $region18: #{tpu_custom_call.1} parent=11 // pred_check_branch
          %141 = sbr.rel (%p139) target = $region20
        $region19: #{tpu_custom_call.1} parent=11 // pred_region
          %143 = vsyncadd [#allocation6], 0
          %s145 = sshll.u32 %s2, 4
          %s146 = int_to_ptr.hbm [resolvable:$true] %s145
          %s147 = sshll.u32 [#allocation7], 4
          %s148 = int_to_ptr.vmem [resolvable:$true] %s147
          %150 = dma.hbm_to_vmem [thread:$0]  %s146, 48, %s148, [#allocation6]
        $region20: #{tpu_custom_call.1} parent=11 // pred_fallthru
          _
      $region12: #{tpu_custom_call.1} parent=5 // pred_fallthru
        _
      %p151 = scmp.lt.s32.totalorder %s16, 2
      // Predicated region
      $region21: #{tpu_custom_call.1} parent=5 // pred_check
        %p152 = pneg %p151
      $region22: #{tpu_custom_call.1} parent=5 // pred_check_branch
        %154 = sbr.rel (%p152) target = $region24
      $region23: #{tpu_custom_call.1} parent=5 // pred_region
        // Predicated region
        $region25: #{tpu_custom_call.1} parent=23 // pred_check
          %p155 = pneg %p36
        $region26: #{tpu_custom_call.1} parent=23 // pred_check_branch
          %157 = sbr.rel (%p155) target = $region28
        $region27: #{tpu_custom_call.1} parent=23 // pred_region
          %s158 = sand.u32 %s26, 1
          %s159 = scalar_lea.sflag [#allocation3], %s158
          %s160 = sand.u32 %s26, 1
          %s161 = smul.addr %s160, 8
          %s162 = scalar_lea.vmem [#allocation2], %s161
          %164 = vsyncadd %s159, 0
          %s165 = smul.addr %s16, 8
          %s166 = scalar_lea.hbm %s0, %s165
          %s168 = sshll.u32 %s166, 4
          %s169 = int_to_ptr.hbm [resolvable:$true] %s168
          %s170 = sshll.u32 %s162, 4
          %s171 = int_to_ptr.vmem [resolvable:$true] %s170
          %173 = dma.hbm_to_vmem [thread:$0]  %s169, 128, %s171, %s159
        $region28: #{tpu_custom_call.1} parent=23 // pred_fallthru
          _
      $region24: #{tpu_custom_call.1} parent=5 // pred_fallthru
        _
      %p174 = scmp.le.s32.totalorder 1, %s16
      %p175 = scmp.lt.s32.totalorder %s16, 3
      %p176 = pnand %p174, %p175
      %p177 = pneg %p176
      // Predicated region
      $region29: #{tpu_custom_call.1} parent=5 // pred_check
        _
      $region30: #{tpu_custom_call.1} parent=5 // pred_check_branch
        %179 = sbr.rel (%p176) target = $region32
      $region31: #{tpu_custom_call.1} parent=5 // pred_region
        %s180 = ssub.s32 %s16, 1
        %s181 = sand.u32 %s29, 1
        %s182 = scalar_lea.sflag [#allocation3], %s181
        %s183 = sand.u32 %s29, 1
        %s184 = smul.addr %s183, 8
        %s185 = scalar_lea.vmem [#allocation2], %s184
        // Predicated region
        $region33: #{tpu_custom_call.1} parent=31 // pred_check
          %p186 = pneg %p42
        $region34: #{tpu_custom_call.1} parent=31 // pred_check_branch
          %188 = sbr.rel (%p186) target = $region36
        $region35: #{tpu_custom_call.1} parent=31 // pred_region
          %190 = dma.done %s182, 128
        $region36: #{tpu_custom_call.1} parent=31 // pred_fallthru
          _
        // Predicated region
        $region37: #{tpu_custom_call.1} parent=31 // pred_check
          %p191 = pneg %p63
        $region38: #{tpu_custom_call.1} parent=31 // pred_check_branch
          %193 = sbr.rel (%p191) target = $region40
        $region39: #{tpu_custom_call.1} parent=31 // pred_region
          %195 = dma.done [#allocation6], 1536
        $region40: #{tpu_custom_call.1} parent=31 // pred_fallthru
          _
        // Predicated region
        $region41: #{tpu_custom_call.1} parent=31 // pred_check
          %p196 = pneg %p84
        $region42: #{tpu_custom_call.1} parent=31 // pred_check_branch
          %198 = sbr.rel (%p196) target = $region44
        $region43: #{tpu_custom_call.1} parent=31 // pred_region
          %200 = dma.done [#allocation6], 48
        $region44: #{tpu_custom_call.1} parent=31 // pred_fallthru
          _
        %s201 = sand.u32 %s29, 1
        %s202 = scalar_lea.sflag [#allocation3], %s201
        %s203 = sand.u32 %s29, 1
        %s204 = smul.addr %s203, 8
        %s205 = scalar_lea.vmem [#allocation2], %s204
        %p206 = pneg %p42
        %p207 = pneg %p39
        %p208 = pneg %p63
        %p209 = pneg %p60
        %p210 = pneg %p84
        %p211 = pneg %p81
        %p212 = pneg %p110
        %p213 = pneg %p107
        %s214 = sand.u32 %s97, 1
        %s215 = scalar_lea.sflag [#allocation4], %s214
        %s216 = sand.u32 %s97, 1
        %s217 = smul.addr %s216, 8
        %s218 = scalar_lea.vmem [#allocation8], %s217
        %v220 = vld [vmem:[%s185] sm:$0xff]
        %v221 = vpack.c.bf16 %v220, %v220
        %v222 = vld [vmem:[#allocation5] sm:$0xff]
        %v223 = vld [vmem:[#allocation5 + $0x8] sm:$0xff]
        %v224 = vld [vmem:[#allocation5 + $0x10] sm:$0xff]
        %v225 = vld [vmem:[#allocation5 + $0x18] sm:$0xff]
        %v226 = vld [vmem:[#allocation5 + $0x20] sm:$0xff]
        %v227 = vld [vmem:[#allocation5 + $0x28] sm:$0xff]
        %v228 = vld [vmem:[#allocation5 + $0x30] sm:$0xff]
        %v229 = vld [vmem:[#allocation5 + $0x38] sm:$0xff]
        %v230 = vld [vmem:[#allocation5 + $0x40] sm:$0xff]
        %v231 = vld [vmem:[#allocation5 + $0x48] sm:$0xff]
        %v232 = vld [vmem:[#allocation5 + $0x50] sm:$0xff]
        %v233 = vld [vmem:[#allocation5 + $0x58] sm:$0xff]
        %v234 = vpack.c.bf16 %v225, %v222
        %v235 = vpack.c.bf16 %v226, %v223
        %v236 = vpack.c.bf16 %v227, %v224
        %v237 = vpack.c.bf16 %v231, %v228
        %v238 = vpack.c.bf16 %v232, %v229
        %v239 = vpack.c.bf16 %v233, %v230
        %v240 = vld [vmem:[#allocation7] sm:$0x7]
        %v242 = vperm.slane %v240, 0
        %v243 = vperm.slane %v240, 1
        %v244 = vperm.slane %v240, 2
        %vm248 = vcmask 261120
        %v250 = vsel %vm248, %v221, 0
        %252 = vmatpush.bf16.msra.mxu0 0
        %253 = vmatpush.bf16.msra.mxu0 0
        %254 = vmatpush.bf16.msra.mxu0 0
        %255 = vmatpush.bf16.msra.mxu0 0
        %256 = vmatpush.bf16.msra.mxu0 0
        %257 = vmatpush.bf16.msra.mxu0 0
        %258 = vmatpush.bf16.msra.mxu0 %v237
        %259 = vmatpush.bf16.msra.mxu0 %v234
        %260 = vmatmul.bf16.gmra.mxu0 %v250
        %v261 = vpop.f32.mrf.mxu0
        %v262 = vadd.f32 %v242, %v261
        %v263 = vpop.f32.mrf.mxu0
        %264 = vdwg.mxu0
        %265 = vmatpush.bf16.msra.mxu0 0
        %266 = vmatpush.bf16.msra.mxu0 0
        %267 = vmatpush.bf16.msra.mxu0 0
        %268 = vmatpush.bf16.msra.mxu0 0
        %269 = vmatpush.bf16.msra.mxu0 0
        %270 = vmatpush.bf16.msra.mxu0 0
        %271 = vmatpush.bf16.msra.mxu0 %v238
        %272 = vmatpush.bf16.msra.mxu0 %v235
        %273 = vmatmul.bf16.gmra.mxu0 %v250
        %v274 = vpop.f32.mrf.mxu0
        %v275 = vadd.f32 %v243, %v274
        %v276 = vpop.f32.mrf.mxu0
        %277 = vdwg.mxu0
        %278 = vmatpush.bf16.msra.mxu0 0
        %279 = vmatpush.bf16.msra.mxu0 0
        %280 = vmatpush.bf16.msra.mxu0 0
        %281 = vmatpush.bf16.msra.mxu0 0
        %282 = vmatpush.bf16.msra.mxu0 0
        %283 = vmatpush.bf16.msra.mxu0 0
        %284 = vmatpush.bf16.msra.mxu0 %v239
        %285 = vmatpush.bf16.msra.mxu0 %v236
        %286 = vmatmul.bf16.gmra.mxu0 %v250
        %v287 = vpop.f32.mrf.mxu0
        %v288 = vadd.f32 %v244, %v287
        %v289 = vpop.f32.mrf.mxu0
        %290 = vdwg.mxu0
        %v291 = vpack.c.bf16 %v262, %v262
        %v292 = vpack.c.bf16 %v275, %v275
        %v293 = vpack.c.bf16 %v288, %v288
        %294 = vmatpush.bf16.xpose.msra.mxu0 0
        %295 = vmatpush.bf16.xpose.msra.mxu0 0
        %296 = vmatpush.bf16.xpose.msra.mxu0 0
        %297 = vmatpush.bf16.xpose.msra.mxu0 0
        %298 = vmatpush.bf16.xpose.msra.mxu0 0
        %299 = vmatpush.bf16.xpose.msra.mxu0 0
        %300 = vmatpush.bf16.xpose.msra.mxu0 0
        %301 = vmatpush.bf16.xpose.msra.mxu0 %v292
        %302 = vmatmul.bf16.gmra.mxu0 %v291
        %v303 = vpop.f32.mrf.mxu0
        %v304 = vadd.f32 0.0, %v303
        %v305 = vpop.f32.mrf.mxu0
        %306 = vdwg.mxu0
        %v307 = vmul.f32 %v304, 0.17677669
        %vm308 = vcmask 64512
        %v309 = vsel %vm308, %v307, -inf
        %310 = vmax.xlane.f32.xlu0 %v309
        %v311 = vpop.xlane.xlu0 %310
        %v312 = vsub.f32 %v307, %v311
        %v313 = vmul.f32 %v312, 1.442695
        %v314 = vpow.pop %v313
        %v315 = vsel %vm308, %v314, 0.0
        %316 = vadd.xlane.f32.xlu0 %v315
        %v317 = vpop.xlane.xlu0 %316
        %v318 = vrcp.pop %v317
        %v319 = vmul.f32 %v317, %v318
        %v320 = vsub.f32 1.0, %v319
        %v321 = vmul.f32 %v318, %v320
        %v322 = vadd.f32 %v318, %v321
        %vm323 = vweird.f32 %v317
        %vm324 = vweird.f32 %v318
        %vm325 = vmor %vm323, %vm324
        %v326 = vsel %vm325, %v318, %v322
        %v327 = vand.u32 2147483647, %v317
        %vm328 = vcmp.eq.f32.partialorder %v327, 8.507059e+37
        %v329 = vand.u32 %v317, 2147483648
        %v330 = vor.u32 1.1754944e-38, %v329
        %v331 = vsel %vm328, %v330, %v326
        %v332 = vmul.f32 %v314, %v331
        %v333 = vpack.c.bf16 %v332, %v332
        %v335 = vsel %vm308, %v333, 0
        %vm337 = vcmask 1043456
        %v339 = vsel %vm337, %v293, 0
        %341 = vmatpush.bf16.msra.mxu0 0
        %342 = vmatpush.bf16.msra.mxu0 0
        %343 = vmatpush.bf16.msra.mxu0 0
        %344 = vmatpush.bf16.msra.mxu0 0
        %345 = vmatpush.bf16.msra.mxu0 0
        %346 = vmatpush.bf16.msra.mxu0 0
        %347 = vmatpush.bf16.msra.mxu0 0
        %348 = vmatpush.bf16.msra.mxu0 %v339
        %349 = vmatmul.bf16.gmra.mxu0 %v335
        %v350 = vpop.f32.mrf.mxu0
        %v351 = vadd.f32 0.0, %v350
        %v352 = vpop.f32.mrf.mxu0
        %353 = vdwg.mxu0
        %354 = vst [vmem:[%s218] sm:$0xff] %v351
        %s355 = sand.u32 %s97, 1
        %s356 = scalar_lea.sflag [#allocation4], %s355
        %s357 = sand.u32 %s97, 1
        %s358 = smul.addr %s357, 8
        %s359 = scalar_lea.vmem [#allocation8], %s358
        // Predicated region
        $region45: #{tpu_custom_call.1} parent=31 // pred_check
          %p360 = pneg %p107
        $region46: #{tpu_custom_call.1} parent=31 // pred_check_branch
          %362 = sbr.rel (%p360) target = $region48
        $region47: #{tpu_custom_call.1} parent=31 // pred_region
          %364 = vsyncadd %s356, 0
          %s365 = smul.addr %s21, 8
          %s366 = scalar_lea.hbm %s3, %s365
          %s368 = sshll.u32 %s359, 4
          %s369 = int_to_ptr.vmem [resolvable:$true] %s368
          %s370 = sshll.u32 %s366, 4
          %s371 = int_to_ptr.hbm [resolvable:$true] %s370
          %373 = dma.vmem_to_hbm [thread:$0]  %s369, 128, %s371, %s356
        $region48: #{tpu_custom_call.1} parent=31 // pred_fallthru
          _
      $region32: #{tpu_custom_call.1} parent=5 // pred_fallthru
        _
      %p374 = scmp.le.s32.totalorder 2, %s16
      // Predicated region
      $region49: #{tpu_custom_call.1} parent=5 // pred_check
        %p375 = pneg %p374
      $region50: #{tpu_custom_call.1} parent=5 // pred_check_branch
        %377 = sbr.rel (%p375) target = $region52
      $region51: #{tpu_custom_call.1} parent=5 // pred_region
        %s378 = ssub.s32 %s16, 2
        // Predicated region
        $region53: #{tpu_custom_call.1} parent=51 // pred_check
          %p379 = pneg %p113
        $region54: #{tpu_custom_call.1} parent=51 // pred_check_branch
          %381 = sbr.rel (%p379) target = $region56
        $region55: #{tpu_custom_call.1} parent=51 // pred_region
          %s382 = sand.u32 %s98, 1
          %s383 = scalar_lea.sflag [#allocation4], %s382
          %s384 = sand.u32 %s98, 1
          %s385 = smul.addr %s384, 8
          %s386 = scalar_lea.vmem [#allocation8], %s385
          %388 = dma.done %s383, 128
        $region56: #{tpu_custom_call.1} parent=51 // pred_fallthru
          _
      $region52: #{tpu_custom_call.1} parent=5 // pred_fallthru
        _
    $region6: #{tpu_custom_call.1} parent=1 // loop_footer
      %s20 = sadd.s32 1, %s16
    $region7: #{tpu_custom_call.1} parent=1 // loop_footer_branch
      %15 = sbr.rel target = $region3
    $region8: #{tpu_custom_call.1} parent=1 // loop_exit
      _
    %389 = vsyncpa [#allocation3], 1
    %s390 = scalar_lea.sflag [#allocation3], 1
    %391 = vsyncpa %s390, 1
    %392 = vsyncpa [#allocation6], 1
    %393 = vsyncpa [#allocation4], 1
    %s394 = scalar_lea.sflag [#allocation4], 1
    %395 = vsyncpa %s394, 1

</llo_original>
